<compile_context>
chip_gen: v7x
topology: tpu7x:2x2x1
jax: 0.10.0
libtpu: 0.0.40
codegen_flags: <defaults>
</compile_context>

<pallas_src>
import jax
import jax.numpy as jnp
import numpy as np
from jax import lax
from jax.experimental import pallas as pl
from jax.experimental.pallas import tpu as pltpu


def _round_up(x, m):
    return (x + m - 1) // m * m


def _vmem_budget_bytes():
    """Generation-aware VMEM budget (v5e/v6e: 128 MiB, v7x: 64 MiB)."""
    cap = 64 * 1024 * 1024                          # conservative fallback (v7x)
    try:
        info = pltpu.get_tpu_info()
        cap = int(getattr(info, "vmem_capacity_bytes", cap)) or cap
    except Exception:
        pass
    vmem_limit = min(int(cap * 0.85), 112 * 1024 * 1024)
    budget = vmem_limit - 4 * 1024 * 1024           # headroom for Mosaic scratch
    return budget, vmem_limit


def _num_tensorcores():
    """Best-effort TensorCore count (v7x has 2 per chip); defaults to 1."""
    try:
        info = pltpu.get_tpu_info()
        for attr in ("num_cores", "core_count", "num_tensorcores",
                     "tensorcores_per_chip"):
            v = getattr(info, attr, None)
            if isinstance(v, int) and v > 0:
                return v
    except Exception:
        pass
    return 1


# --------------------------------------------------------------------------
# One-time weight prep (hoisted out of the per-call path).
# --------------------------------------------------------------------------
def prepare_copy_generator_weights(W, b, pad_idx, *, max_vt=1024):
    tvocab, D = W.shape
    VT = min(max_vt, _round_up(tvocab, 128))        # vocab tile, multiple of 128
    VPAD = _round_up(tvocab, VT)                    # padded target vocab
    n_vocab = VPAD // VT

    # Every vocab tile must contain at least one finite logit column, otherwise
    # the online-softmax running max would be -inf (exp(-inf - -inf) = NaN).
    last_cols = tvocab - (n_vocab - 1) * VT
    assert last_cols >= 1
    assert not (last_cols == 1 and pad_idx == tvocab - 1), (
        "degenerate tiling: last vocab tile would hold only the PAD column")

    Wt = jnp.zeros((D, VPAD), jnp.bfloat16).at[:, :tvocab].set(
        W.T.astype(jnp.bfloat16))
    b2 = jnp.full((1, VPAD), -jnp.inf, dtype=jnp.float32)
    b2 = b2.at[0, :tvocab].set(b.astype(jnp.float32))
    b2 = b2.at[0, pad_idx].set(-jnp.inf)
    return dict(Wt=Wt, b2=b2, VT=VT, VPAD=VPAD, n_vocab=n_vocab,
                tvocab=tvocab, D=D, pad_idx=pad_idx)


# --------------------------------------------------------------------------
# Copy path: tiny per-batch matmul  (attn * gate) @ src_map
# Output laid out (tlen, batch*CPAD) so the (t, b) row order is a free reshape.
# --------------------------------------------------------------------------
def _copy_path_kernel(attn_ref, src_ref, gate_ref, out_ref):
    # attn_ref: (1, tlen, slen) f32, gate_ref: (1, tlen, 1) f32,
    # src_ref:  (1, slen, CPAD) bf16 (one-hot -> exact), out_ref: (tlen, CPAD) f32
    mul_attn = (attn_ref[0] * gate_ref[0]).astype(jnp.bfloat16)
    out_ref[...] = jnp.dot(mul_attn, src_ref[0],
                           preferred_element_type=jnp.float32)


# --------------------------------------------------------------------------
# Main softmax / gate kernel (online softmax, output block doubles as stash).
# --------------------------------------------------------------------------
def _make_softmax_gate_kernel(VT, VPAD, CPAD, n_vocab):
    def kernel(h_ref, w_ref, b_ref, gate_ref, copy_ref,
               out_ref, tmax_ref, m_ref, l_ref):
        j = pl.program_id(1)

        # bf16 x bf16 MXU matmul, f32 accumulation.  The PAD-token column and the
        # padded-vocab columns carry a -inf bias.
        logits = jnp.dot(h_ref[...], w_ref[...],
                         preferred_element_type=jnp.float32) + b_ref[...]

        @pl.when(j == 0)
        def _():
            m_ref[...] = jnp.full(m_ref.shape, -jnp.inf, m_ref.dtype)
            l_ref[...] = jnp.zeros(l_ref.shape, l_ref.dtype)

        # Online softmax: running max / denominator, exp done under the
        # MXU/DMA-bound per-tile phase (EUP slot is otherwise idle).
        m_prev = m_ref[...]
        l_prev = l_ref[...]
        tile_max = jnp.max(logits, axis=-1, keepdims=True)
        m_new = jnp.maximum(m_prev, tile_max)
        alpha = jnp.exp(m_prev - m_new)              # == 0 at j == 0
        e = jnp.exp(logits - m_new)
        l_ref[...] = alpha * l_prev + jnp.sum(e, axis=-1, keepdims=True)
        m_ref[...] = m_new
        tmax_ref[j] = m_new                          # per-tile max for finalize

        # Stash e directly in the VMEM-resident output block (no extra stash).
        e = e.astype(out_ref.dtype)
        if n_vocab == 1:
            out_ref[:, 0:VT] = e
        else:
            off = pl.multiple_of(j * VT, 128)
            out_ref[:, pl.ds(off, VT)] = e

        @pl.when(j == pl.num_programs(1) - 1)
        def _():
            # Finalize: one read+scale+write pass over the resident block.
            m_fin = m_ref[...]
            scale = (1.0 - gate_ref[...]) * pl.reciprocal(l_ref[...],
                                                          approx=False)

            if n_vocab <= 8:                         # small vocab: static slices
                for jj in range(n_vocab):
                    corr = jnp.exp(tmax_ref[jj] - m_fin) * scale
                    vals = out_ref[:, jj * VT:(jj + 1) * VT].astype(jnp.float32)
                    out_ref[:, jj * VT:(jj + 1) * VT] = (
                        vals * corr).astype(out_ref.dtype)
            else:                                    # large vocab: compact loop
                def body(jj, carry):
                    off = pl.multiple_of(jj * VT, 128)
                    corr = jnp.exp(tmax_ref[jj] - m_fin) * scale
                    vals = out_ref[:, pl.ds(off, VT)].astype(jnp.float32)
                    out_ref[:, pl.ds(off, VT)] = (vals * corr).astype(
                        out_ref.dtype)
                    return carry

                lax.fori_loop(0, n_vocab, body, 0, unroll=2)

            out_ref[:, VPAD:VPAD + CPAD] = copy_ref[...].astype(out_ref.dtype)

    return kernel


def _select_row_tile(N, D, VT, VPAD, CPAD, n_vocab, out_bytes, budget):
    """Largest row tile (multiple of 16) whose working set fits the budget."""
    def usage(tm):
        out_cols = VPAD + CPAD
        resident = 2 * tm * out_cols * out_bytes             # out block (x2 buf)
        resident += (n_vocab + 2) * tm * 128 * 4             # tmax / m / l scratch
        streamed = 2 * (D * VT * 2 + 8 * VT * 4)             # W tile + bias (x2)
        streamed += 2 * (tm * D * 2 + tm * 128 * 4 + tm * CPAD * 4)  # h/gate/copy
        return resident + streamed

    TM = _round_up(min(512, max(N, 16)), 16)
    while TM > 16 and usage(TM) > budget:
        TM = _round_up(TM // 2, 16)
    if usage(TM) > budget:
        raise ValueError(
            "CopyGenerator Pallas kernel does not fit in VMEM: needs "
            f"{usage(TM)} bytes at TM={TM}, VT={VT}; lower max_vt or use a "
            "bf16 output slab (out_dtype=jnp.bfloat16).")

    # Guarantee work for both TensorCores on multi-core chips when N is small.
    if _num_tensorcores() > 1 and N > 16 and _round_up(N, TM) // TM == 1:
        TM = min(TM, _round_up(-(-N // 2), 16))
    return TM


# --------------------------------------------------------------------------
# Full forward
# --------------------------------------------------------------------------
def copy_generator_forward(hidden, attn, src_map, W, b, Wc, bc, pad_idx,
                           *, prepared=None, out_dtype=jnp.float32):
    f32 = jnp.float32
    N, D = hidden.shape
    slen, batch, cvocab = src_map.shape
    assert attn.shape == (N, slen)
    assert N % batch == 0
    tlen = N // batch

    prep = (prepared if prepared is not None
            else prepare_copy_generator_weights(W, b, pad_idx))
    assert prep["D"] == D and prep["pad_idx"] == pad_idx
    VT, VPAD, n_vocab = prep["VT"], prep["VPAD"], prep["n_vocab"]
    tvocab = prep["tvocab"]
    Wt, b2 = prep["Wt"], prep["b2"]

    CPAD = _round_up(cvocab, 128)
    out_bytes = jnp.dtype(out_dtype).itemsize

    budget, vmem_limit = _vmem_budget_bytes()
    TM = _select_row_tile(N, D, VT, VPAD, CPAD, n_vocab, out_bytes, budget)
    NPAD = _round_up(N, TM)
    n_row = NPAD // TM

    # ---------------- copy gate (tiny [N,1] matmul, once, in XLA) -----------
    gate = jax.nn.sigmoid(hidden.astype(f32) @ Wc.T.astype(f32)
                          + bc.astype(f32))                       # [N, 1]

    # ---------------- copy path: (attn*g) @ src_map, batch-gridded ----------
    attn_b = attn.astype(f32).reshape(tlen, batch, slen).transpose(1, 0, 2)
    gate_b = gate.reshape(tlen, batch, 1).transpose(1, 0, 2)
    src_b = jnp.zeros((batch, slen, CPAD), jnp.bfloat16).at[:, :, :cvocab].set(
        src_map.astype(jnp.bfloat16).transpose(1, 0, 2))

    copy_flat = pl.pallas_call(
        _copy_path_kernel,
        out_shape=jax.ShapeDtypeStruct((tlen, batch * CPAD), f32),
        grid_spec=pltpu.PrefetchScalarGridSpec(
            num_scalar_prefetch=0,
            grid=(batch,),
            in_specs=[
                pl.BlockSpec((1, tlen, slen), lambda i: (i, 0, 0)),
                pl.BlockSpec((1, slen, CPAD), lambda i: (i, 0, 0)),
                pl.BlockSpec((1, tlen, 1), lambda i: (i, 0, 0)),
            ],
            out_specs=pl.BlockSpec((tlen, CPAD), lambda i: (0, i)),
        ),
        compiler_params=pltpu.CompilerParams(
            dimension_semantics=("parallel",)),
    )(attn_b, src_b, gate_b)

    # (tlen, batch*CPAD) row-major == (t, b) row order -> reshape is free.
    copy_rows = copy_flat.reshape(N, CPAD)

    # ---------------- row padding for the main kernel -----------------------
    h_bf = hidden.astype(jnp.bfloat16)
    gate_pad = gate
    if NPAD != N:
        h_bf = jnp.zeros((NPAD, D), jnp.bfloat16).at[:N].set(h_bf)
        gate_pad = jnp.zeros((NPAD, 1), f32).at[:N].set(gate)
        copy_rows = jnp.zeros((NPAD, CPAD), f32).at[:N].set(copy_rows)

    # ---------------- main softmax / gate kernel ----------------------------
    kernel = _make_softmax_gate_kernel(VT, VPAD, CPAD, n_vocab)
    out_slab = pl.pallas_call(
        kernel,
        out_shape=jax.ShapeDtypeStruct((NPAD, VPAD + CPAD), out_dtype),
        grid_spec=pltpu.PrefetchScalarGridSpec(
            num_scalar_prefetch=0,
            grid=(n_row, n_vocab),
            in_specs=[
                pl.BlockSpec((TM, D), lambda i, j: (i, 0)),
                pl.BlockSpec((D, VT), lambda i, j: (0, j)),
                pl.BlockSpec((1, VT), lambda i, j: (0, j)),
                pl.BlockSpec((TM, 1), lambda i, j: (i, 0)),
                pl.BlockSpec((TM, CPAD), lambda i, j: (i, 0)),
            ],
            out_specs=pl.BlockSpec((TM, VPAD + CPAD), lambda i, j: (i, 0)),
            scratch_shapes=[
                pltpu.VMEM((n_vocab, TM, 1), jnp.float32),   # per-tile max
                pltpu.VMEM((TM, 1), jnp.float32),            # running max
                pltpu.VMEM((TM, 1), jnp.float32),            # running denom
            ]),
        compiler_params=pltpu.CompilerParams(
            dimension_semantics=("parallel", "arbitrary"),
            vmem_limit_bytes=vmem_limit),
    )(h_bf, Wt, b2, gate_pad, copy_rows)

    # ---------------- final layout -------------------------------------------
    if tvocab == VPAD and cvocab == CPAD and N == NPAD:
        return out_slab                     # already exactly [out_prob | copy]
    return jnp.concatenate(
        [out_slab[:N, :tvocab], out_slab[:N, VPAD:VPAD + cvocab]], axis=1)


# --------------------------------------------------------------------------
# Pure-JAX reference mirroring the PyTorch forward.
# --------------------------------------------------------------------------
def copy_generator_ref(hidden, attn, src_map, W, b, Wc, bc, pad_idx):
    logits = hidden @ W.T + b
    logits = logits.at[:, pad_idx].set(-jnp.inf)
    prob = jax.nn.softmax(logits, axis=1)
    copy = jax.nn.sigmoid(hidden @ Wc.T + bc)
    out_prob = prob * (1.0 - copy)
    mul_attn = attn * copy
    slen, batch, cvocab = src_map.shape
    ma = mul_attn.reshape(-1, batch, slen).transpose(1, 0, 2)        # [B, T, S]
    cp = jnp.einsum('bts,bsc->btc', ma, src_map.transpose(1, 0, 2))
    cp = cp.transpose(1, 0, 2).reshape(-1, cvocab)
    return jnp.concatenate([out_prob, cp], axis=1)


if __name__ == "__main__":
    # Small synthetic shapes consistent with the module's forward.
    batch, tlen, slen = 2, 4, 8
    rnn_size = 32          # opt.rnn_size
    tvocab = 32            # len(tgt_dict)
    cvocab = 16            # copy vocab size (src_map last dim)
    pad_idx = 0            # tgt_dict.stoi[PAD_WORD] (synthetic)

    key = jax.random.PRNGKey(0)
    k_h, k_a, k_s, k_w, k_b, k_wc, k_bc = jax.random.split(key, 7)

    hidden = jax.random.normal(k_h, (tlen * batch, rnn_size), dtype=jnp.float32)
    attn = jax.nn.softmax(jax.random.normal(k_a, (tlen * batch, slen)),
                          axis=1).astype(jnp.float32)
    src_ids = jax.random.randint(k_s, (slen, batch), 0, cvocab)
    src_map = jax.nn.one_hot(src_ids, cvocab, dtype=jnp.float32)

    W = (jax.random.normal(k_w, (tvocab, rnn_size), dtype=jnp.float32)
         / jnp.sqrt(rnn_size))
    b = jax.random.normal(k_b, (tvocab,), dtype=jnp.float32) * 0.01
    Wc = (jax.random.normal(k_wc, (1, rnn_size), dtype=jnp.float32)
          / jnp.sqrt(rnn_size))
    bc = jax.random.normal(k_bc, (1,), dtype=jnp.float32) * 0.01

    # One-time weight prep (reused across forward calls).
    prep = prepare_copy_generator_weights(W, b, pad_idx)

    out = jax.block_until_ready(
        copy_generator_forward(hidden, attn, src_map, W, b, Wc, bc, pad_idx,
                               prepared=prep))
    assert out.shape == (tlen * batch, tvocab + cvocab)

    # Tight check against a reference using the same bf16-rounded matmul
    # operands for the softmax path (the kernel streams hidden/W as bf16).
    hq = hidden.astype(jnp.bfloat16).astype(jnp.float32)
    Wq = W.astype(jnp.bfloat16).astype(jnp.float32)
    ref_q = jax.block_until_ready(
        copy_generator_ref(hq, attn, src_map, Wq, b, Wc, bc, pad_idx))
    np.testing.assert_allclose(np.asarray(out), np.asarray(ref_q),
                               atol=5e-3, rtol=5e-3)

    # Loose sanity check against the full-f32 reference (bf16 quantization).
    ref = jax.block_until_ready(
        copy_generator_ref(hidden, attn, src_map, W, b, Wc, bc, pad_idx))
    np.testing.assert_allclose(np.asarray(out), np.asarray(ref),
                               atol=3e-2, rtol=3e-2)

    print("KERNEL_OK")
</pallas_src>

<mosaic_0001>
module attributes {stable_mosaic.version = 11 : i64} {
  func.func @_copy_path_kernel(%arg0: i32, %arg1: memref<1x4x8xf32, #tpu.memory_space<vmem>>, %arg2: memref<1x8x128xbf16, #tpu.memory_space<vmem>>, %arg3: memref<1x4x1xf32, #tpu.memory_space<vmem>>, %arg4: memref<4x128xf32, #tpu.memory_space<vmem>>) attributes {dimension_semantics = [#tpu.dimension_semantics<parallel>], iteration_bounds = array<i64: 2>, scalar_prefetch = 0 : i64, scratch_operands = 0 : i64, tpu.core_type = #tpu.core_type<tc>, window_params = [{transform_indices = @transform_0, window_bounds = array<i64: 1, 4, 8>}, {transform_indices = @transform_1, window_bounds = array<i64: 1, 8, 128>}, {transform_indices = @transform_2, window_bounds = array<i64: 1, 4, 1>}, {transform_indices = @transform_3, window_bounds = array<i64: 4, 128>}]} {
    %c0 = arith.constant 0 : index
    %c0_0 = arith.constant 0 : index
    %c0_1 = arith.constant 0 : index
    %0 = vector.load %arg1[%c0, %c0_0, %c0_1] : memref<1x4x8xf32, #tpu.memory_space<vmem>>, vector<1x4x8xf32>
    %1 = vector.shape_cast %0 : vector<1x4x8xf32> to vector<4x8xf32>
    %c0_2 = arith.constant 0 : index
    %c0_3 = arith.constant 0 : index
    %c0_4 = arith.constant 0 : index
    %2 = vector.load %arg3[%c0_2, %c0_3, %c0_4] : memref<1x4x1xf32, #tpu.memory_space<vmem>>, vector<1x4x1xf32>
    %3 = vector.shape_cast %2 : vector<1x4x1xf32> to vector<4x1xf32>
    %4 = vector.broadcast %3 : vector<4x1xf32> to vector<4x8xf32>
    %5 = arith.mulf %1, %4 : vector<4x8xf32>
    %6 = arith.truncf %5 : vector<4x8xf32> to vector<4x8xbf16>
    %c0_5 = arith.constant 0 : index
    %c0_6 = arith.constant 0 : index
    %c0_7 = arith.constant 0 : index
    %7 = vector.load %arg2[%c0_5, %c0_6, %c0_7] : memref<1x8x128xbf16, #tpu.memory_space<vmem>>, vector<1x8x128xbf16>
    %8 = vector.shape_cast %7 : vector<1x8x128xbf16> to vector<8x128xbf16>
    %cst = arith.constant dense<0.000000e+00> : vector<4x128xf32>
    %9 = tpu.matmul %6, %8, %cst {dimension_numbers = #tpu.dot_dimension_numbers<[1], [0], [0], [1], [0, 0, 1, 1], [], []>} : vector<4x8xbf16>, vector<8x128xbf16>, vector<4x128xf32> -> vector<4x128xf32>
    %c0_8 = arith.constant 0 : index
    %c0_9 = arith.constant 0 : index
    %10 = vector.load %arg4[%c0_8, %c0_9] : memref<4x128xf32, #tpu.memory_space<vmem>>, vector<4x128xf32>
    tpu.vector_store %arg4[%c0_8, %c0_9], %9 {strides = array<i32>} : memref<4x128xf32, #tpu.memory_space<vmem>>, vector<4x128xf32>,
    return
  }
  func.func @transform_0(%arg0: i32) -> (i32, i32, i32) {
    %c0_i32 = arith.constant 0 : i32
    %c0_i32_0 = arith.constant 0 : i32
    %c0_i32_1 = arith.constant 0 : i32
    return %arg0, %c0_i32, %c0_i32_0 : i32, i32, i32
  }
  func.func @transform_1(%arg0: i32) -> (i32, i32, i32) {
    %c0_i32 = arith.constant 0 : i32
    %c0_i32_0 = arith.constant 0 : i32
    %c0_i32_1 = arith.constant 0 : i32
    return %arg0, %c0_i32, %c0_i32_0 : i32, i32, i32
  }
  func.func @transform_2(%arg0: i32) -> (i32, i32, i32) {
    %c0_i32 = arith.constant 0 : i32
    %c0_i32_0 = arith.constant 0 : i32
    %c0_i32_1 = arith.constant 0 : i32
    return %arg0, %c0_i32, %c0_i32_0 : i32, i32, i32
  }
  func.func @transform_3(%arg0: i32) -> (i32, i32) {
    %c0_i32 = arith.constant 0 : i32
    %c0_i32_0 = arith.constant 0 : i32
    return %c0_i32, %arg0 : i32, i32
  }
}

</mosaic_0001>

<llo_original>
// kernel: tpu_custom_call.1
$region0: #{tpu_custom_call.1}
  #allocation0 [shape = 'u32[]', space=smem, size = 0x4, offset = 0x4, fixed_abs, tag = 'smem constant byte address 0x4 - core index']
  #allocation1 [shape = 'u32[144,128]{1,0:T(1,128)}', space=vmem, size = 0x12000, scoped, tag = 'internal scratch']
  %s0 = inlined_call_operand.vmem [shape: f32[2,4,8], index: 0, kind: input, shape index: {}]
  %s1 = inlined_call_operand.hbm [shape: bf16[2,8,128], index: 1, kind: input, shape index: {}]
  %s2 = inlined_call_operand.vmem [shape: f32[2,4,1], index: 2, kind: input, shape index: {}]
  %s3 = inlined_call_operand.hbm [shape: f32[4,256], index: 3, kind: output, shape index: {}]
  %s4 = sld [smem:[#allocation0]]
  $region49: #{tpu_custom_call.1} parent=0
    _
  %s6 = ssub.s32 1, %s4
  %s7 = scalar_select 0, %s6, %s4
  $region1: #{tpu_custom_call.1} parent=0
    #allocation2 [shape = 'u8[4096]{0}', space=vmem, size = 0x1000, scoped, tag = 'input window, operand 1']
    #allocation3 [shape = 's32[2]{0}', space=sflag, size = 0x8, scoped, tag = 'scoped memory for tpu_custom_call.1']
    #allocation4 [shape = 's32[2]{0}', space=sflag, size = 0x8, scoped, tag = 'scoped memory for tpu_custom_call.1']
    #allocation5 [shape = 'u8[4096]{0}', space=vmem, size = 0x1000, scoped, tag = 'output window, operand 0']
    %8 = vsyncpa [#allocation3], 0
    %s9 = scalar_lea.sflag [#allocation3], 1
    %10 = vsyncpa %s9, 0
    %11 = vsyncpa [#allocation4], 0
    %s12 = scalar_lea.sflag [#allocation4], 1
    %13 = vsyncpa %s12, 0
    loop: start=0, step=1, limit=4
    $region2: #{tpu_custom_call.1} parent=1 // loop_pre_header
      _
    $region3: #{tpu_custom_call.1} parent=1 // loop_header
      %s15 = sphi 0, %s19
      %p16 = scmp.ge.s32.totalorder %s15, 4
      %s25 = sphi 0, %s27
      %s28 = sphi 0, %s25
      %s29 = sphi 0, %s28
      %s45 = sphi 0, %s29
      %s51 = sphi 0, %s53
      %s54 = sphi 0, %s51
      %s55 = sphi 0, %s54
      %s71 = sphi 0, %s55
      %s77 = sphi 0, %s79
      %s80 = sphi 0, %s77
      %s81 = sphi 0, %s80
      %s97 = sphi 0, %s81
      %s103 = sphi 0, %s105
      %s106 = sphi 0, %s103
      %s107 = sphi 0, %s106
      %s123 = sphi 0, %s107
    $region4: #{tpu_custom_call.1} parent=1 // loop_header_branch
      %18 = sbr.rel (%p16) target = $region8
    $region5: #{tpu_custom_call.1} parent=1 // loop_body
      %s20 = ssub.s32 %s15, 1
      %s21 = ssub.s32 %s15, 2
      %s22 = sadd.s32 %s15, 1
      %s23 = ssub.s32 %s15, %s22
      %p24 = scmp.eq.s32.totalorder %s23, 0
      %s26 = sadd.s32 %s25, 1
      %s27 = scalar_select %p24, %s25, %s26
      %p30 = pneg %p24
      %p31 = scmp.eq.s32.totalorder %s15, 1
      %p32 = por %p30, %p31
      %p33 = scmp.ne.s32.totalorder %s25, %s28
      %p34 = scmp.eq.s32.totalorder %s15, 0
      %p35 = por %p33, %p34
      %p36 = scmp.ne.s32.totalorder %s25, %s28
      %p37 = scmp.eq.s32.totalorder %s20, 1
      %p38 = por %p36, %p37
      %p39 = scmp.ne.s32.totalorder %s28, %s29
      %p40 = scmp.eq.s32.totalorder %s20, 0
      %p41 = por %p39, %p40
      %p42 = scmp.ne.s32.totalorder %s28, %s29
      %p43 = scmp.eq.s32.totalorder %s21, 1
      %p44 = por %p42, %p43
      %p46 = scmp.ne.s32.totalorder %s29, %s45
      %p47 = scmp.eq.s32.totalorder %s21, 0
      %p48 = por %p46, %p47
      %s49 = ssub.s32 %s15, %s22
      %p50 = scmp.eq.s32.totalorder %s49, 0
      %s52 = sadd.s32 %s51, 1
      %s53 = scalar_select %p50, %s51, %s52
      %p56 = pneg %p50
      %p57 = scmp.eq.s32.totalorder %s15, 1
      %p58 = por %p56, %p57
      %p59 = scmp.ne.s32.totalorder %s51, %s54
      %p60 = scmp.eq.s32.totalorder %s15, 0
      %p61 = por %p59, %p60
      %p62 = scmp.ne.s32.totalorder %s51, %s54
      %p63 = scmp.eq.s32.totalorder %s20, 1
      %p64 = por %p62, %p63
      %p65 = scmp.ne.s32.totalorder %s54, %s55
      %p66 = scmp.eq.s32.totalorder %s20, 0
      %p67 = por %p65, %p66
      %p68 = scmp.ne.s32.totalorder %s54, %s55
      %p69 = scmp.eq.s32.totalorder %s21, 1
      %p70 = por %p68, %p69
      %p72 = scmp.ne.s32.totalorder %s55, %s71
      %p73 = scmp.eq.s32.totalorder %s21, 0
      %p74 = por %p72, %p73
      %s75 = ssub.s32 %s15, %s22
      %p76 = scmp.eq.s32.totalorder %s75, 0
      %s78 = sadd.s32 %s77, 1
      %s79 = scalar_select %p76, %s77, %s78
      %p82 = pneg %p76
      %p83 = scmp.eq.s32.totalorder %s15, 1
      %p84 = por %p82, %p83
      %p85 = scmp.ne.s32.totalorder %s77, %s80
      %p86 = scmp.eq.s32.totalorder %s15, 0
      %p87 = por %p85, %p86
      %p88 = scmp.ne.s32.totalorder %s77, %s80
      %p89 = scmp.eq.s32.totalorder %s20, 1
      %p90 = por %p88, %p89
      %p91 = scmp.ne.s32.totalorder %s80, %s81
      %p92 = scmp.eq.s32.totalorder %s20, 0
      %p93 = por %p91, %p92
      %p94 = scmp.ne.s32.totalorder %s80, %s81
      %p95 = scmp.eq.s32.totalorder %s21, 1
      %p96 = por %p94, %p95
      %p98 = scmp.ne.s32.totalorder %s81, %s97
      %p99 = scmp.eq.s32.totalorder %s21, 0
      %p100 = por %p98, %p99
      %s101 = ssub.s32 %s15, %s22
      %p102 = scmp.eq.s32.totalorder %s101, 0
      %s104 = sadd.s32 %s103, 1
      %s105 = scalar_select %p102, %s103, %s104
      %p108 = pneg %p102
      %p109 = scmp.eq.s32.totalorder %s15, 1
      %p110 = por %p108, %p109
      %p111 = scmp.ne.s32.totalorder %s103, %s106
      %p112 = scmp.eq.s32.totalorder %s15, 0
      %p113 = por %p111, %p112
      %p114 = scmp.ne.s32.totalorder %s103, %s106
      %p115 = scmp.eq.s32.totalorder %s20, 1
      %p116 = por %p114, %p115
      %p117 = scmp.ne.s32.totalorder %s106, %s107
      %p118 = scmp.eq.s32.totalorder %s20, 0
      %p119 = por %p117, %p118
      %p120 = scmp.ne.s32.totalorder %s106, %s107
      %p121 = scmp.eq.s32.totalorder %s21, 1
      %p122 = por %p120, %p121
      %p124 = scmp.ne.s32.totalorder %s107, %s123
      %p125 = scmp.eq.s32.totalorder %s21, 0
      %p126 = por %p124, %p125
      %p127 = scmp.le.s32.totalorder 1, %s15
      %p128 = scmp.lt.s32.totalorder %s15, 3
      %p129 = pnand %p127, %p128
      %p130 = pneg %p129
      // Predicated region
      $region9: #{tpu_custom_call.1} parent=5 // pred_check
        _
      $region10: #{tpu_custom_call.1} parent=5 // pred_check_branch
        %132 = sbr.rel (%p129) target = $region12
      $region11: #{tpu_custom_call.1} parent=5 // pred_region
        %s133 = ssub.s32 %s15, 1
      $region12: #{tpu_custom_call.1} parent=5 // pred_fallthru
        _
      %p134 = scmp.lt.s32.totalorder %s15, 2
      // Predicated region
      $region13: #{tpu_custom_call.1} parent=5 // pred_check
        %p135 = pneg %p134
      $region14: #{tpu_custom_call.1} parent=5 // pred_check_branch
        %137 = sbr.rel (%p135) target = $region16
      $region15: #{tpu_custom_call.1} parent=5 // pred_region
        // Predicated region
        $region17: #{tpu_custom_call.1} parent=15 // pred_check
          %p138 = pneg %p35
        $region18: #{tpu_custom_call.1} parent=15 // pred_check_branch
          %140 = sbr.rel (%p138) target = $region20
        $region19: #{tpu_custom_call.1} parent=15 // pred_region
          %p141 = scmp.lt.s32.totalorder %s15, 1
          %s142 = scalar_select %p141, %s15, 1
          %s143 = smul.addr %s142, 4
          %s144 = scalar_lea.vmem %s0, %s143
        $region20: #{tpu_custom_call.1} parent=15 // pred_fallthru
          _
        // Predicated region
        $region21: #{tpu_custom_call.1} parent=15 // pred_check
          %p145 = pneg %p61
        $region22: #{tpu_custom_call.1} parent=15 // pred_check_branch
          %147 = sbr.rel (%p145) target = $region24
        $region23: #{tpu_custom_call.1} parent=15 // pred_region
          %s148 = sand.u32 %s51, 1
          %s149 = scalar_lea.sflag [#allocation3], %s148
          %s150 = sand.u32 %s51, 1
          %s151 = smul.addr %s150, 4
          %s152 = scalar_lea.vmem [#allocation2], %s151
          %s154 = ssub.s32 64, 64
          %155 = vsyncadd %s149, %s154
          %s156 = smul.addr %s15, 64
          %s157 = scalar_lea.hbm %s1, %s156
          %s159 = sshll.u32 %s152, 4
          %s160 = int_to_ptr.vmem [resolvable:$true] %s159
          %162 = dma.hbm_to_vmem [thread:$0]  %s157, 64, %s160, %s149
        $region24: #{tpu_custom_call.1} parent=15 // pred_fallthru
          _
        // Predicated region
        $region25: #{tpu_custom_call.1} parent=15 // pred_check
          %p163 = pneg %p87
        $region26: #{tpu_custom_call.1} parent=15 // pred_check_branch
          %165 = sbr.rel (%p163) target = $region28
        $region27: #{tpu_custom_call.1} parent=15 // pred_region
          %p166 = scmp.lt.s32.totalorder %s15, 1
          %s167 = scalar_select %p166, %s15, 1
          %s168 = smul.addr %s167, 4
          %s169 = scalar_lea.vmem %s2, %s168
        $region28: #{tpu_custom_call.1} parent=15 // pred_fallthru
          _
      $region16: #{tpu_custom_call.1} parent=5 // pred_fallthru
        _
      %p170 = scmp.le.s32.totalorder 1, %s15
      %p171 = scmp.lt.s32.totalorder %s15, 3
      %p172 = pnand %p170, %p171
      %p173 = pneg %p172
      // Predicated region
      $region29: #{tpu_custom_call.1} parent=5 // pred_check
        _
      $region30: #{tpu_custom_call.1} parent=5 // pred_check_branch
        %175 = sbr.rel (%p172) target = $region32
      $region31: #{tpu_custom_call.1} parent=5 // pred_region
        %s176 = ssub.s32 %s15, 1
        %s177 = sand.u32 %s54, 1
        %s178 = scalar_lea.sflag [#allocation3], %s177
        %s179 = sand.u32 %s54, 1
        %s180 = smul.addr %s179, 4
        %s181 = scalar_lea.vmem [#allocation2], %s180
        // Predicated region
        $region33: #{tpu_custom_call.1} parent=31 // pred_check
          %p182 = pneg %p67
        $region34: #{tpu_custom_call.1} parent=31 // pred_check_branch
          %184 = sbr.rel (%p182) target = $region36
        $region35: #{tpu_custom_call.1} parent=31 // pred_region
          %185 = dma.done %s178, 64
        $region36: #{tpu_custom_call.1} parent=31 // pred_fallthru
          _
        %p186 = scmp.lt.s32.totalorder %s20, 1
        %s187 = scalar_select %p186, %s20, 1
        %s188 = smul.addr %s187, 4
        %s189 = scalar_lea.vmem %s0, %s188
        %p190 = pneg %p41
        %p191 = pneg %p38
        %s192 = sand.u32 %s54, 1
        %s193 = scalar_lea.sflag [#allocation3], %s192
        %s194 = sand.u32 %s54, 1
        %s195 = smul.addr %s194, 4
        %s196 = scalar_lea.vmem [#allocation2], %s195
        %p197 = pneg %p67
        %p198 = pneg %p64
        %p199 = scmp.lt.s32.totalorder %s20, 1
        %s200 = scalar_select %p199, %s20, 1
        %s201 = smul.addr %s200, 4
        %s202 = scalar_lea.vmem %s2, %s201
        %p203 = pneg %p93
        %p204 = pneg %p90
        %p205 = pneg %p119
        %p206 = pneg %p116
        %s207 = sand.u32 %s106, 1
        %s208 = scalar_lea.sflag [#allocation4], %s207
        %s209 = sand.u32 %s106, 1
        %s210 = smul.addr %s209, 4
        %s211 = scalar_lea.vmem [#allocation5], %s210
        %p212 = scmp.lt.s32.totalorder %s20, 1
        %s213 = scalar_select %p212, %s20, 1
        %s214 = smul.addr %s213, 4
        %s215 = scalar_lea.vmem %s0, %s214
        %p216 = scmp.lt.s32.totalorder %s20, 1
        %s217 = scalar_select %p216, %s20, 1
        %s218 = smul.addr %s217, 4
        %s219 = scalar_lea.vmem %s2, %s218
        %v221 = vld [vmem:[%s215] sm:$0xf]
        %v222 = vld [vmem:[%s219] sm:$0xf]
        %224 = vset.pattern.permute.xlu0 0
        %225 = vperm.xlu0 %224, %v222
        %v226 = vpop.permute.xlu0 %225
        %v228 = vmul.f32 %v221, %v226
        %v229 = vpack.c.bf16 %v228, %v228
        %v230 = vld [vmem:[%s181] sm:$0xf]
        %vm231 = vcmask 64512
        %v233 = vsel %vm231, %v229, 0
        %vm235 = vcmask 1043456
        %v237 = vsel %vm235, %v230, 0
        %239 = vmatprep.subr.bf16.mxu0 0
        %240 = vmatpush1.bf16.msra.mxu0 %v237
        %241 = vmatprep.subr.bf16.mxu0 0
        %242 = vmatpush1.bf16.msra.mxu0 0
        %243 = vmatprep.subr.bf16.mxu0 0
        %244 = vmatpush1.bf16.msra.mxu0 0
        %245 = vmatprep.subr.bf16.mxu0 0
        %246 = vmatpush1.bf16.msra.mxu0 0
        %247 = vmatprep.subr.bf16.mxu0 0
        %248 = vmatpush1.bf16.msra.mxu0 0
        %249 = vmatprep.subr.bf16.mxu0 0
        %250 = vmatpush1.bf16.msra.mxu0 0
        %251 = vmatprep.subr.bf16.mxu0 0
        %252 = vmatpush1.bf16.msra.mxu0 0
        %253 = vmatprep.subr.bf16.mxu0 0
        %254 = vmatpush1.bf16.msra.mxu0 0
        %255 = vmatprep.subr.bf16.mxu0 0
        %256 = vmatpush1.bf16.msra.mxu0 0
        %257 = vmatprep.subr.bf16.mxu0 0
        %258 = vmatpush1.bf16.msra.mxu0 0
        %259 = vmatprep.subr.bf16.mxu0 0
        %260 = vmatpush1.bf16.msra.mxu0 0
        %261 = vmatprep.subr.bf16.mxu0 0
        %262 = vmatpush1.bf16.msra.mxu0 0
        %263 = vmatprep.subr.bf16.mxu0 0
        %264 = vmatpush1.bf16.msra.mxu0 0
        %265 = vmatprep.subr.bf16.mxu0 0
        %266 = vmatpush1.bf16.msra.mxu0 0
        %267 = vmatprep.subr.bf16.mxu0 0
        %268 = vmatpush1.bf16.msra.mxu0 0
        %269 = vmatprep.subr.bf16.mxu0 0
        %270 = vmatpush1.bf16.msra.mxu0 0
        %271 = vmatprep.mubr.bf16.mxu0 0
        %272 = vmatmul.mubr.bf16.gmra.mrb[0].mxu0 %v233
        %v273 = vpop.f32.mrb[0].mxu0
        %v274 = vadd.f32 0.0, %v273
        %v275 = vpop.f32.mrb[0].mxu0
        %v276 = vpop.f32.mrb[0].mxu0
        %v277 = vpop.f32.mrb[0].mxu0
        %278 = vdwg.mxu0
        %279 = vst [vmem:[%s211] sm:$0xf] %v274
        %s280 = sand.u32 %s106, 1
        %s281 = scalar_lea.sflag [#allocation4], %s280
        %s282 = sand.u32 %s106, 1
        %s283 = smul.addr %s282, 4
        %s284 = scalar_lea.vmem [#allocation5], %s283
        // Predicated region
        $region37: #{tpu_custom_call.1} parent=31 // pred_check
          %p285 = pneg %p116
        $region38: #{tpu_custom_call.1} parent=31 // pred_check_branch
          %287 = sbr.rel (%p285) target = $region40
        $region39: #{tpu_custom_call.1} parent=31 // pred_region
          %s289 = ssub.s32 64, 64
          %290 = vsyncadd %s281, %s289
          %s291 = smul.addr %s20, 64
          %s292 = scalar_lea.hbm %s3, %s291
          %s294 = sshll.u32 %s284, 4
          %s295 = int_to_ptr.vmem [resolvable:$true] %s294
          %297 = dma.vmem_to_hbm [thread:$0]  %s295, 64, %s292, %s281
        $region40: #{tpu_custom_call.1} parent=31 // pred_fallthru
          _
      $region32: #{tpu_custom_call.1} parent=5 // pred_fallthru
        _
      %p298 = scmp.le.s32.totalorder 2, %s15
      // Predicated region
      $region41: #{tpu_custom_call.1} parent=5 // pred_check
        %p299 = pneg %p298
      $region42: #{tpu_custom_call.1} parent=5 // pred_check_branch
        %301 = sbr.rel (%p299) target = $region44
      $region43: #{tpu_custom_call.1} parent=5 // pred_region
        %s302 = ssub.s32 %s15, 2
        // Predicated region
        $region45: #{tpu_custom_call.1} parent=43 // pred_check
          %p303 = pneg %p122
        $region46: #{tpu_custom_call.1} parent=43 // pred_check_branch
          %305 = sbr.rel (%p303) target = $region48
        $region47: #{tpu_custom_call.1} parent=43 // pred_region
          %s306 = sand.u32 %s107, 1
          %s307 = scalar_lea.sflag [#allocation4], %s306
          %s308 = sand.u32 %s107, 1
          %s309 = smul.addr %s308, 4
          %s310 = scalar_lea.vmem [#allocation5], %s309
          %311 = dma.done %s307, 64
        $region48: #{tpu_custom_call.1} parent=43 // pred_fallthru
          _
      $region44: #{tpu_custom_call.1} parent=5 // pred_fallthru
        _
    $region6: #{tpu_custom_call.1} parent=1 // loop_footer
      %s19 = sadd.s32 1, %s15
    $region7: #{tpu_custom_call.1} parent=1 // loop_footer_branch
      %14 = sbr.rel target = $region3
    $region8: #{tpu_custom_call.1} parent=1 // loop_exit
      _
    %312 = vsyncpa [#allocation3], 1
    %s313 = scalar_lea.sflag [#allocation3], 1
    %314 = vsyncpa %s313, 1
    %315 = vsyncpa [#allocation4], 1
    %s316 = scalar_lea.sflag [#allocation4], 1
    %317 = vsyncpa %s316, 1

</llo_original>
